<compile_context>
chip_gen: v7x
topology: tpu7x:2x2x1
jax: 0.10.0
libtpu: 0.0.40
codegen_flags: <defaults>
</compile_context>

<pallas_src>
import jax
import jax.numpy as jnp
from jax import lax
from jax.experimental import pallas as pl
from jax.experimental.pallas import tpu as pltpu


def _parallel_linear_kernel(x_ref, w_ref, b_ref, o_ref):
    # x_ref: (1, TT, H) input tile (streamed)
    # w_ref: (D, H)     stacked decoder weights (resident)
    # b_ref: (D, 1)     stacked decoder biases  (resident)
    # o_ref: (1, D, TT) output tile already in (B, D, T) layout (T on lanes)
    x = x_ref[0]        # (TT, H)
    w = w_ref[...]      # (D, H)
    # y[d, t] = sum_h w[d, h] * x[t, h]  ==  W @ X^T (contract H of both operands;
    # no materialized transpose, result lands with D on sublanes / T on lanes).
    y = lax.dot_general(
        w, x,
        dimension_numbers=(((1,), (1,)), ((), ())),
        preferred_element_type=jnp.float32,
    )                   # (D, TT) float32
    o_ref[0] = (y + b_ref[...]).astype(o_ref.dtype)


def _choose_t_tile(t: int) -> int:
    # Prefer a lane-dense tile (multiple of 128) that divides T.
    for tt in (2048, 1024, 512, 256, 128):
        if t % tt == 0:
            return tt
    if t < 128:
        return t  # small T: whole axis (block equals full dim -> always valid)
    # Ragged T: pick a lane-aligned tile <= T; last tile handled by masked writes.
    for tt in (512, 256, 128):
        if tt <= t:
            return tt
    return t


def parallel_linear_decoders(x, weights, biases):
    """
    x:       (B, T, H)
    weights: (D, H)   (row d = weight of nn.Linear(H, 1) decoder d)
    biases:  (D,)
    returns: (B, D, T) == torch.stack([dec(x).squeeze(-1) for dec in decs], dim=1)
    """
    B, T, H = x.shape
    D = weights.shape[0]
    TT = _choose_t_tile(T)
    grid = (B, pl.cdiv(T, TT))

    w2d = weights.astype(jnp.float32)
    b2d = biases.reshape(D, 1).astype(jnp.float32)

    itemsize = jnp.dtype(x.dtype).itemsize
    out_itemsize = jnp.dtype(x.dtype).itemsize
    cost = pl.CostEstimate(
        flops=2 * B * T * H * D,
        transcendentals=0,
        bytes_accessed=(B * T * H) * itemsize      # read X
        + (B * D * T) * out_itemsize               # write Y
        + (D * H) * 4 + D * 4,                     # read W, b
    )

    return pl.pallas_call(
        _parallel_linear_kernel,
        out_shape=jax.ShapeDtypeStruct((B, D, T), x.dtype),
        grid=grid,
        in_specs=[
            pl.BlockSpec((1, TT, H), lambda b, t: (b, t, 0)),   # x tiles (streamed)
            pl.BlockSpec((D, H), lambda b, t: (0, 0)),          # weights (resident)
            pl.BlockSpec((D, 1), lambda b, t: (0, 0)),          # bias    (resident)
        ],
        out_specs=pl.BlockSpec((1, D, TT), lambda b, t: (b, 0, t)),
        compiler_params=pltpu.CompilerParams(
            dimension_semantics=("parallel", "parallel"),
        ),
        cost_estimate=cost,
    )(x, w2d, b2d)


if __name__ == "__main__":
    # Small deterministic config: input_size H=32, output_sizes=[1]*4, x: (B=2, T=8, H=32)
    B, T, H, D = 2, 8, 32, 4

    key = jax.random.PRNGKey(0)
    kx, kw, kb = jax.random.split(key, 3)

    x = jax.random.normal(kx, (B, T, H), dtype=jnp.float32)
    # Deterministic synthetic parameters (shapes follow nn.Linear(H, 1) per decoder).
    weights = jax.random.normal(kw, (D, H), dtype=jnp.float32) * 0.1
    biases = jax.random.normal(kb, (D,), dtype=jnp.float32) * 0.1

    out = jax.block_until_ready(parallel_linear_decoders(x, weights, biases))

    # Plain-JAX reference of the PyTorch forward.
    ref = jnp.einsum("bth,dh->bdt", x, weights) + biases[None, :, None]
    assert out.shape == (B, D, T)
    assert jnp.allclose(out, ref, atol=1e-5, rtol=1e-5)

    print("KERNEL_OK")
</pallas_src>

<mosaic_0001>
module attributes {stable_mosaic.version = 11 : i64} {
  func.func @_parallel_linear_kernel(%arg0: i32, %arg1: i32, %arg2: memref<1x8x32xf32, #tpu.memory_space<vmem>>, %arg3: memref<4x32xf32, #tpu.memory_space<vmem>>, %arg4: memref<4x1xf32, #tpu.memory_space<vmem>>, %arg5: memref<1x4x8xf32, #tpu.memory_space<vmem>>) attributes {dimension_semantics = [#tpu.dimension_semantics<parallel>, #tpu.dimension_semantics<parallel>], iteration_bounds = array<i64: 2, 1>, scalar_prefetch = 0 : i64, scratch_operands = 0 : i64, tpu.core_type = #tpu.core_type<tc>, window_params = [{transform_indices = @transform_0, window_bounds = array<i64: 1, 8, 32>}, {pipeline_mode = #tpu.pipeline_mode<synchronous>, transform_indices = @transform_1, window_bounds = array<i64: 4, 32>}, {pipeline_mode = #tpu.pipeline_mode<synchronous>, transform_indices = @transform_2, window_bounds = array<i64: 4, 1>}, {transform_indices = @transform_3, window_bounds = array<i64: 1, 4, 8>}]} {
    %c0 = arith.constant 0 : index
    %c0_0 = arith.constant 0 : index
    %c0_1 = arith.constant 0 : index
    %0 = vector.load %arg2[%c0, %c0_0, %c0_1] : memref<1x8x32xf32, #tpu.memory_space<vmem>>, vector<1x8x32xf32>
    %1 = vector.shape_cast %0 : vector<1x8x32xf32> to vector<8x32xf32>
    %c0_2 = arith.constant 0 : index
    %c0_3 = arith.constant 0 : index
    %2 = vector.load %arg3[%c0_2, %c0_3] : memref<4x32xf32, #tpu.memory_space<vmem>>, vector<4x32xf32>
    %cst = arith.constant dense<0.000000e+00> : vector<4x8xf32>
    %3 = tpu.matmul %2, %1, %cst {dimension_numbers = #tpu.dot_dimension_numbers<[1], [1], [0], [0], [0, 0, 1, 0], [], []>} : vector<4x32xf32>, vector<8x32xf32>, vector<4x8xf32> -> vector<4x8xf32>
    %c0_4 = arith.constant 0 : index
    %c0_5 = arith.constant 0 : index
    %4 = vector.load %arg4[%c0_4, %c0_5] : memref<4x1xf32, #tpu.memory_space<vmem>>, vector<4x1xf32>
    %5 = vector.broadcast %4 : vector<4x1xf32> to vector<4x8xf32>
    %6 = arith.addf %3, %5 : vector<4x8xf32>
    %c0_6 = arith.constant 0 : index
    %c0_7 = arith.constant 0 : index
    %c0_8 = arith.constant 0 : index
    %7 = vector.load %arg5[%c0_6, %c0_7, %c0_8] : memref<1x4x8xf32, #tpu.memory_space<vmem>>, vector<1x4x8xf32>
    %8 = vector.shape_cast %7 : vector<1x4x8xf32> to vector<4x8xf32>
    %9 = vector.shape_cast %6 : vector<4x8xf32> to vector<1x4x8xf32>
    tpu.vector_store %arg5[%c0_6, %c0_7, %c0_8], %9 {strides = array<i32>} : memref<1x4x8xf32, #tpu.memory_space<vmem>>, vector<1x4x8xf32>,
    return
  }
  func.func @transform_0(%arg0: i32, %arg1: i32) -> (i32, i32, i32) {
    %c0_i32 = arith.constant 0 : i32
    %c0_i32_0 = arith.constant 0 : i32
    return %arg0, %arg1, %c0_i32 : i32, i32, i32
  }
  func.func @transform_1(%arg0: i32, %arg1: i32) -> (i32, i32) {
    %c0_i32 = arith.constant 0 : i32
    %c0_i32_0 = arith.constant 0 : i32
    %c0_i32_1 = arith.constant 0 : i32
    return %c0_i32, %c0_i32_0 : i32, i32
  }
  func.func @transform_2(%arg0: i32, %arg1: i32) -> (i32, i32) {
    %c0_i32 = arith.constant 0 : i32
    %c0_i32_0 = arith.constant 0 : i32
    %c0_i32_1 = arith.constant 0 : i32
    return %c0_i32, %c0_i32_0 : i32, i32
  }
  func.func @transform_3(%arg0: i32, %arg1: i32) -> (i32, i32, i32) {
    %c0_i32 = arith.constant 0 : i32
    %c0_i32_0 = arith.constant 0 : i32
    return %arg0, %c0_i32, %arg1 : i32, i32, i32
  }
}

</mosaic_0001>

<llo_original>
// kernel: tpu_custom_call.1
$region0: #{tpu_custom_call.1}
  #allocation0 [shape = 'u32[]', space=smem, size = 0x4, offset = 0x4, fixed_abs, tag = 'smem constant byte address 0x4 - core index']
  #allocation1 [shape = 'u32[144,128]{1,0:T(1,128)}', space=vmem, size = 0x12000, scoped, tag = 'internal scratch']
  %s0 = inlined_call_operand.hbm [shape: f32[2,8,32], index: 0, kind: input, shape index: {}]
  %s1 = inlined_call_operand.vmem [shape: f32[4,32], index: 1, kind: input, shape index: {}]
  %s2 = inlined_call_operand.vmem [shape: f32[4,1], index: 2, kind: input, shape index: {}]
  %s3 = inlined_call_operand.hbm [shape: f32[2,4,8], index: 3, kind: output, shape index: {}]
  %s4 = sld [smem:[#allocation0]]
  $region49: #{tpu_custom_call.1} parent=0
    _
  %s6 = ssub.s32 1, %s4
  %s7 = scalar_select 0, %s6, %s4
  $region1: #{tpu_custom_call.1} parent=0
    #allocation2 [shape = 'u8[8192]{0}', space=vmem, size = 0x2000, scoped, tag = 'input window, operand 0']
    #allocation3 [shape = 's32[2]{0}', space=sflag, size = 0x8, scoped, tag = 'scoped memory for tpu_custom_call.1']
    #allocation4 [shape = 's32[2]{0}', space=sflag, size = 0x8, scoped, tag = 'scoped memory for tpu_custom_call.1']
    #allocation5 [shape = 'u8[4096]{0}', space=vmem, size = 0x1000, scoped, tag = 'output window, operand 0']
    %8 = vsyncpa [#allocation3], 0
    %s9 = scalar_lea.sflag [#allocation3], 1
    %10 = vsyncpa %s9, 0
    %11 = vsyncpa [#allocation4], 0
    %s12 = scalar_lea.sflag [#allocation4], 1
    %13 = vsyncpa %s12, 0
    loop: start=0, step=1, limit=4
    $region2: #{tpu_custom_call.1} parent=1 // loop_pre_header
      _
    $region3: #{tpu_custom_call.1} parent=1 // loop_header
      %s15 = sphi 0, %s19
      %p16 = scmp.ge.s32.totalorder %s15, 4
      %s22 = sphi 0, %s34
      %s23 = sphi 0, %s30
      %s24 = sphi 0, %s22
      %s25 = sphi 0, %s23
      %s26 = sphi 0, %s24
      %s27 = sphi 0, %s25
      %s39 = sphi 0, %s41
      %s42 = sphi 0, %s39
      %s43 = sphi 0, %s42
      %s59 = sphi 0, %s43
      %s63 = sphi 0, %s63
      %s65 = sphi 0, %s63
      %s66 = sphi 0, %s65
      %s80 = sphi 0, %s66
      %s84 = sphi 0, %s84
      %s86 = sphi 0, %s84
      %s87 = sphi 0, %s86
      %s101 = sphi 0, %s87
      %s109 = sphi 0, %s111
      %s112 = sphi 0, %s109
      %s113 = sphi 0, %s112
      %s129 = sphi 0, %s113
    $region4: #{tpu_custom_call.1} parent=1 // loop_header_branch
      %18 = sbr.rel (%p16) target = $region8
    $region5: #{tpu_custom_call.1} parent=1 // loop_body
      %s20 = ssub.s32 %s15, 1
      %s21 = ssub.s32 %s15, 2
      %s28 = sadd.s32 1, %s23
      %p29 = scmp.ge.s32.totalorder %s28, 1
      %s30 = scalar_select %p29, 0, %s28
      %s31 = sadd.s32 1, %s22
      %s32 = scalar_select %p29, %s31, %s22
      %p33 = scmp.ge.s32.totalorder %s32, 2
      %s34 = scalar_select %p33, 0, %s32
      %s35 = ssub.s32 %s22, %s34
      %s36 = ssub.s32 %s23, %s30
      %s37 = sor.u32 %s35, %s36
      %p38 = scmp.eq.s32.totalorder %s37, 0
      %s40 = sadd.s32 %s39, 1
      %s41 = scalar_select %p38, %s39, %s40
      %p44 = pneg %p38
      %p45 = scmp.eq.s32.totalorder %s15, 1
      %p46 = por %p44, %p45
      %p47 = scmp.ne.s32.totalorder %s39, %s42
      %p48 = scmp.eq.s32.totalorder %s15, 0
      %p49 = por %p47, %p48
      %p50 = scmp.ne.s32.totalorder %s39, %s42
      %p51 = scmp.eq.s32.totalorder %s20, 1
      %p52 = por %p50, %p51
      %p53 = scmp.ne.s32.totalorder %s42, %s43
      %p54 = scmp.eq.s32.totalorder %s20, 0
      %p55 = por %p53, %p54
      %p56 = scmp.ne.s32.totalorder %s42, %s43
      %p57 = scmp.eq.s32.totalorder %s21, 1
      %p58 = por %p56, %p57
      %p60 = scmp.ne.s32.totalorder %s43, %s59
      %p61 = scmp.eq.s32.totalorder %s21, 0
      %p62 = por %p60, %p61
      %s64 = sadd.s32 %s63, 1
      %p67 = scmp.eq.s32.totalorder %s15, 1
      %p68 = scmp.ne.s32.totalorder %s63, %s65
      %p69 = scmp.eq.s32.totalorder %s15, 0
      %p70 = por %p68, %p69
      %p71 = scmp.ne.s32.totalorder %s63, %s65
      %p72 = scmp.eq.s32.totalorder %s20, 1
      %p73 = por %p71, %p72
      %p74 = scmp.ne.s32.totalorder %s65, %s66
      %p75 = scmp.eq.s32.totalorder %s20, 0
      %p76 = por %p74, %p75
      %p77 = scmp.ne.s32.totalorder %s65, %s66
      %p78 = scmp.eq.s32.totalorder %s21, 1
      %p79 = por %p77, %p78
      %p81 = scmp.ne.s32.totalorder %s66, %s80
      %p82 = scmp.eq.s32.totalorder %s21, 0
      %p83 = por %p81, %p82
      %s85 = sadd.s32 %s84, 1
      %p88 = scmp.eq.s32.totalorder %s15, 1
      %p89 = scmp.ne.s32.totalorder %s84, %s86
      %p90 = scmp.eq.s32.totalorder %s15, 0
      %p91 = por %p89, %p90
      %p92 = scmp.ne.s32.totalorder %s84, %s86
      %p93 = scmp.eq.s32.totalorder %s20, 1
      %p94 = por %p92, %p93
      %p95 = scmp.ne.s32.totalorder %s86, %s87
      %p96 = scmp.eq.s32.totalorder %s20, 0
      %p97 = por %p95, %p96
      %p98 = scmp.ne.s32.totalorder %s86, %s87
      %p99 = scmp.eq.s32.totalorder %s21, 1
      %p100 = por %p98, %p99
      %p102 = scmp.ne.s32.totalorder %s87, %s101
      %p103 = scmp.eq.s32.totalorder %s21, 0
      %p104 = por %p102, %p103
      %s105 = ssub.s32 %s22, %s34
      %s106 = ssub.s32 %s23, %s30
      %s107 = sor.u32 %s105, %s106
      %p108 = scmp.eq.s32.totalorder %s107, 0
      %s110 = sadd.s32 %s109, 1
      %s111 = scalar_select %p108, %s109, %s110
      %p114 = pneg %p108
      %p115 = scmp.eq.s32.totalorder %s15, 1
      %p116 = por %p114, %p115
      %p117 = scmp.ne.s32.totalorder %s109, %s112
      %p118 = scmp.eq.s32.totalorder %s15, 0
      %p119 = por %p117, %p118
      %p120 = scmp.ne.s32.totalorder %s109, %s112
      %p121 = scmp.eq.s32.totalorder %s20, 1
      %p122 = por %p120, %p121
      %p123 = scmp.ne.s32.totalorder %s112, %s113
      %p124 = scmp.eq.s32.totalorder %s20, 0
      %p125 = por %p123, %p124
      %p126 = scmp.ne.s32.totalorder %s112, %s113
      %p127 = scmp.eq.s32.totalorder %s21, 1
      %p128 = por %p126, %p127
      %p130 = scmp.ne.s32.totalorder %s113, %s129
      %p131 = scmp.eq.s32.totalorder %s21, 0
      %p132 = por %p130, %p131
      %p133 = scmp.le.s32.totalorder 1, %s15
      %p134 = scmp.lt.s32.totalorder %s15, 3
      %p135 = pnand %p133, %p134
      %p136 = pneg %p135
      // Predicated region
      $region9: #{tpu_custom_call.1} parent=5 // pred_check
        _
      $region10: #{tpu_custom_call.1} parent=5 // pred_check_branch
        %138 = sbr.rel (%p135) target = $region12
      $region11: #{tpu_custom_call.1} parent=5 // pred_region
        %s139 = ssub.s32 %s15, 1
        // Predicated region
        $region13: #{tpu_custom_call.1} parent=11 // pred_check
          %p140 = pneg %p76
        $region14: #{tpu_custom_call.1} parent=11 // pred_check_branch
          %142 = sbr.rel (%p140) target = $region16
        $region15: #{tpu_custom_call.1} parent=11 // pred_region
          _
        $region16: #{tpu_custom_call.1} parent=11 // pred_fallthru
          _
        // Predicated region
        $region17: #{tpu_custom_call.1} parent=11 // pred_check
          %p143 = pneg %p97
        $region18: #{tpu_custom_call.1} parent=11 // pred_check_branch
          %145 = sbr.rel (%p143) target = $region20
        $region19: #{tpu_custom_call.1} parent=11 // pred_region
          _
        $region20: #{tpu_custom_call.1} parent=11 // pred_fallthru
          _
      $region12: #{tpu_custom_call.1} parent=5 // pred_fallthru
        _
      %p146 = scmp.lt.s32.totalorder %s15, 2
      // Predicated region
      $region21: #{tpu_custom_call.1} parent=5 // pred_check
        %p147 = pneg %p146
      $region22: #{tpu_custom_call.1} parent=5 // pred_check_branch
        %149 = sbr.rel (%p147) target = $region24
      $region23: #{tpu_custom_call.1} parent=5 // pred_region
        // Predicated region
        $region25: #{tpu_custom_call.1} parent=23 // pred_check
          %p150 = pneg %p49
        $region26: #{tpu_custom_call.1} parent=23 // pred_check_branch
          %152 = sbr.rel (%p150) target = $region28
        $region27: #{tpu_custom_call.1} parent=23 // pred_region
          %s153 = sand.u32 %s39, 1
          %s154 = scalar_lea.sflag [#allocation3], %s153
          %s155 = sand.u32 %s39, 1
          %s156 = smul.addr %s155, 8
          %s157 = scalar_lea.vmem [#allocation2], %s156
          %s159 = ssub.s32 128, 128
          %160 = vsyncadd %s154, %s159
          %s161 = sadd.s32 %s23, %s22
          %s162 = smul.addr %s161, 128
          %s163 = scalar_lea.hbm %s0, %s162
          %s165 = sshll.u32 %s157, 4
          %s166 = int_to_ptr.vmem [resolvable:$true] %s165
          %168 = dma.hbm_to_vmem [thread:$0]  %s163, 128, %s166, %s154
        $region28: #{tpu_custom_call.1} parent=23 // pred_fallthru
          _
      $region24: #{tpu_custom_call.1} parent=5 // pred_fallthru
        _
      %p169 = scmp.le.s32.totalorder 1, %s15
      %p170 = scmp.lt.s32.totalorder %s15, 3
      %p171 = pnand %p169, %p170
      %p172 = pneg %p171
      // Predicated region
      $region29: #{tpu_custom_call.1} parent=5 // pred_check
        _
      $region30: #{tpu_custom_call.1} parent=5 // pred_check_branch
        %174 = sbr.rel (%p171) target = $region32
      $region31: #{tpu_custom_call.1} parent=5 // pred_region
        %s175 = ssub.s32 %s15, 1
        %s176 = sand.u32 %s42, 1
        %s177 = scalar_lea.sflag [#allocation3], %s176
        %s178 = sand.u32 %s42, 1
        %s179 = smul.addr %s178, 8
        %s180 = scalar_lea.vmem [#allocation2], %s179
        // Predicated region
        $region33: #{tpu_custom_call.1} parent=31 // pred_check
          %p181 = pneg %p55
        $region34: #{tpu_custom_call.1} parent=31 // pred_check_branch
          %183 = sbr.rel (%p181) target = $region36
        $region35: #{tpu_custom_call.1} parent=31 // pred_region
          %184 = dma.done %s177, 128
        $region36: #{tpu_custom_call.1} parent=31 // pred_fallthru
          _
        %s185 = sand.u32 %s42, 1
        %s186 = scalar_lea.sflag [#allocation3], %s185
        %s187 = sand.u32 %s42, 1
        %s188 = smul.addr %s187, 8
        %s189 = scalar_lea.vmem [#allocation2], %s188
        %p190 = pneg %p55
        %p191 = pneg %p52
        %p192 = pneg %p76
        %p193 = pneg %p73
        %p194 = pneg %p97
        %p195 = pneg %p94
        %p196 = pneg %p125
        %p197 = pneg %p122
        %s198 = sand.u32 %s112, 1
        %s199 = scalar_lea.sflag [#allocation4], %s198
        %s200 = sand.u32 %s112, 1
        %s201 = smul.addr %s200, 4
        %s202 = scalar_lea.vmem [#allocation5], %s201
        %v203 = vld [vmem:[%s180] sm:$0xff]
        %v204 = vld [vmem:[%s1] sm:$0xf]
        %v205 = vld [vmem:[%s2] sm:$0xf]
        %207 = vset.pattern.permute.xlu0 0
        %208 = vperm.xlu0 %207, %v205
        %v209 = vpop.permute.xlu0 %208
        %vm211 = vcmask 261120
        %v213 = vsel %vm211, %v204, 0
        %v216 = vsel %vm211, %v203, 0
        %218 = vmatprep.subr.mxu0 0.0
        %219 = vmatpush1.xpose.msra.mxu0 %v216
        %220 = vmatprep.subr.mxu0 0.0
        %221 = vmatpush1.xpose.msra.mxu0 0.0
        %222 = vmatprep.subr.mxu0 0.0
        %223 = vmatpush1.xpose.msra.mxu0 0.0
        %224 = vmatprep.subr.mxu0 0.0
        %225 = vmatpush1.xpose.msra.mxu0 0.0
        %226 = vmatprep.subr.mxu0 0.0
        %227 = vmatpush1.xpose.msra.mxu0 0.0
        %228 = vmatprep.subr.mxu0 0.0
        %229 = vmatpush1.xpose.msra.mxu0 0.0
        %230 = vmatprep.subr.mxu0 0.0
        %231 = vmatpush1.xpose.msra.mxu0 0.0
        %232 = vmatprep.subr.mxu0 0.0
        %233 = vmatpush1.xpose.msra.mxu0 0.0
        %234 = vmatprep.subr.mxu0 0.0
        %235 = vmatpush1.xpose.msra.mxu0 0.0
        %236 = vmatprep.subr.mxu0 0.0
        %237 = vmatpush1.xpose.msra.mxu0 0.0
        %238 = vmatprep.subr.mxu0 0.0
        %239 = vmatpush1.xpose.msra.mxu0 0.0
        %240 = vmatprep.subr.mxu0 0.0
        %241 = vmatpush1.xpose.msra.mxu0 0.0
        %242 = vmatprep.subr.mxu0 0.0
        %243 = vmatpush1.xpose.msra.mxu0 0.0
        %244 = vmatprep.subr.mxu0 0.0
        %245 = vmatpush1.xpose.msra.mxu0 0.0
        %246 = vmatprep.subr.mxu0 0.0
        %247 = vmatpush1.xpose.msra.mxu0 0.0
        %248 = vmatprep.subr.mxu0 0.0
        %249 = vmatpush1.xpose.msra.mxu0 0.0
        %250 = vmatprep.subr.mxu0 0.0
        %251 = vmatpush1.xpose.msra.mxu0 0.0
        %252 = vmatprep.subr.mxu0 0.0
        %253 = vmatpush1.xpose.msra.mxu0 0.0
        %254 = vmatprep.subr.mxu0 0.0
        %255 = vmatpush1.xpose.msra.mxu0 0.0
        %256 = vmatprep.subr.mxu0 0.0
        %257 = vmatpush1.xpose.msra.mxu0 0.0
        %258 = vmatprep.subr.mxu0 0.0
        %259 = vmatpush1.xpose.msra.mxu0 0.0
        %260 = vmatprep.subr.mxu0 0.0
        %261 = vmatpush1.xpose.msra.mxu0 0.0
        %262 = vmatprep.subr.mxu0 0.0
        %263 = vmatpush1.xpose.msra.mxu0 0.0
        %264 = vmatprep.subr.mxu0 0.0
        %265 = vmatpush1.xpose.msra.mxu0 0.0
        %266 = vmatprep.subr.mxu0 0.0
        %267 = vmatpush1.xpose.msra.mxu0 0.0
        %268 = vmatprep.subr.mxu0 0.0
        %269 = vmatpush1.xpose.msra.mxu0 0.0
        %270 = vmatprep.subr.mxu0 0.0
        %271 = vmatpush1.xpose.msra.mxu0 0.0
        %272 = vmatprep.subr.mxu0 0.0
        %273 = vmatpush1.xpose.msra.mxu0 0.0
        %274 = vmatprep.subr.mxu0 0.0
        %275 = vmatpush1.xpose.msra.mxu0 0.0
        %276 = vmatprep.subr.mxu0 0.0
        %277 = vmatpush1.xpose.msra.mxu0 0.0
        %278 = vmatprep.subr.mxu0 0.0
        %279 = vmatpush1.xpose.msra.mxu0 0.0
        %280 = vmatprep.subr.mxu0 0.0
        %281 = vmatpush1.xpose.msra.mxu0 0.0
        %282 = vmatprep.mubr.f32.mxu0 0.0
        %283 = vmatmul.mubr.f32.gmra.mrb[0].mxu0 %v213
        %v284 = vpop.f32.mrb[0].mxu0
        %v285 = vadd.f32 %v209, %v284
        %v286 = vpop.f32.mrb[0].mxu0
        %287 = vdwg.mxu0
        %vm288 = vcmask 60416
        %289 = vst.msk [vmem:[%s202] sm:$0xf] %vm288, %v285
        %s290 = sand.u32 %s112, 1
        %s291 = scalar_lea.sflag [#allocation4], %s290
        %s292 = sand.u32 %s112, 1
        %s293 = smul.addr %s292, 4
        %s294 = scalar_lea.vmem [#allocation5], %s293
        // Predicated region
        $region37: #{tpu_custom_call.1} parent=31 // pred_check
          %p295 = pneg %p122
        $region38: #{tpu_custom_call.1} parent=31 // pred_check_branch
          %297 = sbr.rel (%p295) target = $region40
        $region39: #{tpu_custom_call.1} parent=31 // pred_region
          %s299 = ssub.s32 64, 64
          %300 = vsyncadd %s291, %s299
          %s301 = sadd.s32 %s25, %s24
          %s302 = smul.addr %s301, 64
          %s303 = scalar_lea.hbm %s3, %s302
          %s305 = sshll.u32 %s294, 4
          %s306 = int_to_ptr.vmem [resolvable:$true] %s305
          %308 = dma.vmem_to_hbm [thread:$0]  %s306, 64, %s303, %s291
        $region40: #{tpu_custom_call.1} parent=31 // pred_fallthru
          _
      $region32: #{tpu_custom_call.1} parent=5 // pred_fallthru
        _
      %p309 = scmp.le.s32.totalorder 2, %s15
      // Predicated region
      $region41: #{tpu_custom_call.1} parent=5 // pred_check
        %p310 = pneg %p309
      $region42: #{tpu_custom_call.1} parent=5 // pred_check_branch
        %312 = sbr.rel (%p310) target = $region44
      $region43: #{tpu_custom_call.1} parent=5 // pred_region
        %s313 = ssub.s32 %s15, 2
        // Predicated region
        $region45: #{tpu_custom_call.1} parent=43 // pred_check
          %p314 = pneg %p128
        $region46: #{tpu_custom_call.1} parent=43 // pred_check_branch
          %316 = sbr.rel (%p314) target = $region48
        $region47: #{tpu_custom_call.1} parent=43 // pred_region
          %s317 = sand.u32 %s113, 1
          %s318 = scalar_lea.sflag [#allocation4], %s317
          %s319 = sand.u32 %s113, 1
          %s320 = smul.addr %s319, 4
          %s321 = scalar_lea.vmem [#allocation5], %s320
          %322 = dma.done %s318, 64
        $region48: #{tpu_custom_call.1} parent=43 // pred_fallthru
          _
      $region44: #{tpu_custom_call.1} parent=5 // pred_fallthru
        _
    $region6: #{tpu_custom_call.1} parent=1 // loop_footer
      %s19 = sadd.s32 1, %s15
    $region7: #{tpu_custom_call.1} parent=1 // loop_footer_branch
      %14 = sbr.rel target = $region3
    $region8: #{tpu_custom_call.1} parent=1 // loop_exit
      _
    %323 = vsyncpa [#allocation3], 1
    %s324 = scalar_lea.sflag [#allocation3], 1
    %325 = vsyncpa %s324, 1
    %326 = vsyncpa [#allocation4], 1
    %s327 = scalar_lea.sflag [#allocation4], 1
    %328 = vsyncpa %s327, 1

</llo_original>
